<compile_context>
chip_gen: v5e
topology: v5e:2x2
jax: 0.10.0
libtpu: 0.0.40
codegen_flags: <defaults>
</compile_context>

<pallas_src>
import functools

import jax
import jax.numpy as jnp
from jax import lax
from jax.experimental import pallas as pl
from jax.experimental.pallas import tpu as pltpu


# ----------------------------- fused kernel ---------------------------------

def _bsconv_fused_kernel(x_ref, w1_ref, b1_ref, wdw_ref, b2_ref, o_ref,
                         mid_ref, *, K, pad, pad_left):
    """One (batch, cout-tile, row-tile) step of fused 1x1 + depthwise KxK conv.

    x_ref   : (1, H, W, Cin)   full-image input block (re-DMAed only per batch)
    w1_ref  : (Cin, TC)        pointwise weight slice
    b1_ref  : (1, TC)          pointwise bias slice
    wdw_ref : (K*K, TC)        depthwise weight slice
    b2_ref  : (1, TC)          depthwise bias slice
    o_ref   : (1, TH, W, TC)   output row tile
    mid_ref : (TH+2*pad, pad_left+W+pad, TC) f32 VMEM scratch with the
              zero-padded pointwise result for this row tile.
    """
    _, H, W, Cin = x_ref.shape
    _, TH, _, TC = o_ref.shape
    r = pl.program_id(2)

    w1 = w1_ref[...]                       # (Cin, TC)   hoisted
    b1 = b1_ref[...]                       # (1, TC)     hoisted

    # Zero the scratch: the border provides the depthwise "same" zero padding,
    # the interior is overwritten below.
    mid_ref[...] = jnp.zeros_like(mid_ref)

    row0 = pl.multiple_of(r * TH, TH)      # first output row of this tile

    def pointwise_rows(dst_row, src_row, nrows):
        # 1x1 conv (matmul over channels) on `nrows` input rows, written into
        # the interior of the padded scratch at a sublane-aligned column.
        xr = x_ref[0, pl.ds(src_row, nrows), :, :]            # (nrows, W, Cin)
        y = jnp.dot(xr.reshape(nrows * W, Cin), w1,
                    preferred_element_type=jnp.float32) + b1  # (nrows*W, TC)
        mid_ref[dst_row:dst_row + nrows, pad_left:pad_left + W, :] = (
            y.reshape(nrows, W, TC))

    # Core rows of this tile (always inside the image since TH | H).
    pointwise_rows(pad, row0, TH)

    # Top halo rows (only exist if there is a row tile above us).
    @pl.when(r > 0)
    def _():
        pointwise_rows(0, row0 - pad, pad)

    # Bottom halo rows (only exist if there is a row tile below us).
    @pl.when(r < pl.num_programs(2) - 1)
    def _():
        pointwise_rows(pad + TH, row0 + TH, pad)

    # Depthwise KxK conv: K*K shifted windows of the padded scratch, VPU MACs.
    wdw = wdw_ref[...].astype(jnp.float32)                    # (K*K, TC) hoisted
    b2 = b2_ref[...].astype(jnp.float32)                      # (1, TC)   hoisted
    acc = jnp.zeros((TH, W, TC), jnp.float32)
    for kh in range(K):
        for kw in range(K):
            col0 = pad_left - pad + kw
            tap = mid_ref[kh:kh + TH, col0:col0 + W, :].astype(jnp.float32)
            acc = acc + tap * wdw[kh * K + kw, :]
    o_ref[0] = (acc + b2).astype(o_ref.dtype)


# ----------------------------- tile selection --------------------------------

def _pick_channel_tile(cout):
    """Largest channel (lane) tile <= 128 that divides Cout."""
    if cout <= 128:
        return cout
    if cout % 128 == 0:
        return 128
    for t in range(128, 0, -1):
        if cout % t == 0:
            return t
    return cout  # unreachable


def _pick_row_tile(H, W, Cin, TC, pad, scratch_w, budget_bytes):
    """Largest row tile TH dividing H whose per-step VMEM footprint fits."""
    itemsize = 4

    def footprint(th):
        x_bytes = 2 * H * W * Cin * itemsize              # double-buffered input
        mid_bytes = (th + 2 * pad) * scratch_w * TC * itemsize
        out_bytes = 2 * th * W * TC * itemsize            # double-buffered output
        return x_bytes + mid_bytes + out_bytes

    fitting = [d for d in range(1, H + 1)
               if H % d == 0 and footprint(d) <= budget_bytes]
    if not fitting:
        return 1
    th = max(fitting)
    # Keep at least 2 row tiles (when H is not tiny) so the spatial grid axis
    # gives the pipeline / v7x dual TensorCores something to shard.
    if th == H and H >= 16:
        smaller = [d for d in fitting if d < H]
        if smaller:
            th = max(smaller)
    return th


# ----------------------------- wrapper ---------------------------------------

def bsconv2d_forward(x_nchw, w1, b1, wdw, b2, *, kernel_size=3, stride=1,
                     dilation=1):
    """BSConv2d forward.

    x_nchw : (N, Cin, H, W)      float32
    w1     : (Cout, Cin, 1, 1)   pointwise conv weight (PyTorch OIHW)
    b1     : (Cout,)             pointwise bias
    wdw    : (Cout, 1, K, K)     depthwise conv weight (groups = Cout)
    b2     : (Cout,)             depthwise bias
    returns: (N, Cout, H, W)
    """
    N, Cin, H, W = x_nchw.shape
    Cout = w1.shape[0]
    K = kernel_size
    assert stride == 1, "TODO(synk): stride > 1 not implemented"
    assert dilation == 1, "TODO(synk): dilation > 1 tap striding not implemented"
    assert K % 2 == 1, "padding rule only matches PyTorch 'same' for odd K"
    pad = (dilation * (K - 1) + 1) // 2      # PyTorch BSConv2d padding rule

    x = jnp.transpose(x_nchw, (0, 2, 3, 1))              # NHWC
    w1m = jnp.transpose(w1.reshape(Cout, Cin))           # (Cin, Cout)
    b1m = b1.reshape(1, Cout)
    wdwm = jnp.transpose(wdw.reshape(Cout, K * K))       # (K*K, Cout)
    b2m = b2.reshape(1, Cout)

    TC = _pick_channel_tile(Cout)
    pad_left = ((pad + 7) // 8) * 8                      # sublane-aligned store
    scratch_w = pad_left + W + pad
    TH = _pick_row_tile(H, W, Cin, TC, pad, scratch_w,
                        budget_bytes=12 * 1024 * 1024)
    THp = TH + 2 * pad
    n_ct = Cout // TC
    n_rt = H // TH

    out_nhwc = pl.pallas_call(
        functools.partial(_bsconv_fused_kernel, K=K, pad=pad,
                          pad_left=pad_left),
        out_shape=jax.ShapeDtypeStruct((N, H, W, Cout), x.dtype),
        grid=(N, n_ct, n_rt),
        in_specs=[
            # Full-image input block; index map ignores (c, r) so the block is
            # only re-DMAed when the batch index changes.
            pl.BlockSpec((1, H, W, Cin), lambda n, c, r: (n, 0, 0, 0)),
            pl.BlockSpec((Cin, TC), lambda n, c, r: (0, c)),
            pl.BlockSpec((1, TC), lambda n, c, r: (0, c)),
            pl.BlockSpec((K * K, TC), lambda n, c, r: (0, c)),
            pl.BlockSpec((1, TC), lambda n, c, r: (0, c)),
        ],
        out_specs=pl.BlockSpec((1, TH, W, TC), lambda n, c, r: (n, r, 0, c)),
        scratch_shapes=[pltpu.VMEM((THp, scratch_w, TC), jnp.float32)],
        compiler_params=pltpu.CompilerParams(
            dimension_semantics=("parallel", "parallel", "parallel"),
            vmem_limit_bytes=32 * 1024 * 1024),
    )(x, w1m, b1m, wdwm, b2m)

    return jnp.transpose(out_nhwc, (0, 3, 1, 2))         # back to NCHW


# ----------------------------- reference --------------------------------------

def _reference(x, w1, b1, wdw, b2, K=3):
    Cout = w1.shape[0]
    pad = (K - 1 + 1) // 2
    mid = lax.conv_general_dilated(
        x, w1, window_strides=(1, 1), padding='VALID',
        dimension_numbers=('NCHW', 'OIHW', 'NCHW'))
    mid = mid + b1[None, :, None, None]
    out = lax.conv_general_dilated(
        mid, wdw, window_strides=(1, 1), padding=((pad, pad), (pad, pad)),
        feature_group_count=Cout,
        dimension_numbers=('NCHW', 'OIHW', 'NCHW'))
    return out + b2[None, :, None, None]


# ----------------------------- main -------------------------------------------

if __name__ == "__main__":
    key = jax.random.PRNGKey(0)
    k_x, k_w1, k_b1, k_wd, k_b2 = jax.random.split(key, 5)

    N, Cin, Cout, H, W, K = 2, 4, 8, 16, 16, 3

    x = jax.random.normal(k_x, (N, Cin, H, W), jnp.float32)
    w1 = jax.random.normal(k_w1, (Cout, Cin, 1, 1), jnp.float32) * 0.1
    b1 = jax.random.normal(k_b1, (Cout,), jnp.float32) * 0.1
    wdw = jax.random.normal(k_wd, (Cout, 1, K, K), jnp.float32) * 0.1
    b2 = jax.random.normal(k_b2, (Cout,), jnp.float32) * 0.1

    out = bsconv2d_forward(x, w1, b1, wdw, b2, kernel_size=K,
                           stride=1, dilation=1)
    out = jax.block_until_ready(out)

    ref = _reference(x, w1, b1, wdw, b2, K=K)
    assert out.shape == ref.shape == (N, Cout, H, W)
    assert jnp.allclose(out, ref, atol=1e-4, rtol=1e-4), "mismatch vs reference"

    print("KERNEL_OK")
</pallas_src>

<mosaic_0001>
module attributes {stable_mosaic.version = 11 : i64} {
  func.func @_bsconv_fused_kernel(%arg0: i32, %arg1: i32, %arg2: i32, %arg3: memref<1x16x16x4xf32, #tpu.memory_space<vmem>>, %arg4: memref<4x8xf32, #tpu.memory_space<vmem>>, %arg5: memref<1x8xf32, #tpu.memory_space<vmem>>, %arg6: memref<9x8xf32, #tpu.memory_space<vmem>>, %arg7: memref<1x8xf32, #tpu.memory_space<vmem>>, %arg8: memref<1x8x16x8xf32, #tpu.memory_space<vmem>>, %arg9: memref<10x25x8xf32, #tpu.memory_space<vmem>>) attributes {dimension_semantics = [#tpu.dimension_semantics<parallel>, #tpu.dimension_semantics<parallel>, #tpu.dimension_semantics<parallel>], iteration_bounds = array<i64: 2, 1, 2>, scalar_prefetch = 0 : i64, scratch_operands = 1 : i64, tpu.core_type = #tpu.core_type<tc>, window_params = [{transform_indices = @transform_0, window_bounds = array<i64: 1, 16, 16, 4>}, {transform_indices = @transform_1, window_bounds = array<i64: 4, 8>}, {transform_indices = @transform_2, window_bounds = array<i64: 1, 8>}, {transform_indices = @transform_3, window_bounds = array<i64: 9, 8>}, {transform_indices = @transform_4, window_bounds = array<i64: 1, 8>}, {transform_indices = @transform_5, window_bounds = array<i64: 1, 8, 16, 8>}]} {
    %c0 = arith.constant 0 : index
    %c0_0 = arith.constant 0 : index
    %0 = vector.load %arg4[%c0, %c0_0] : memref<4x8xf32, #tpu.memory_space<vmem>>, vector<4x8xf32>
    %c0_1 = arith.constant 0 : index
    %c0_2 = arith.constant 0 : index
    %1 = vector.load %arg5[%c0_1, %c0_2] : memref<1x8xf32, #tpu.memory_space<vmem>>, vector<1x8xf32>
    %cst = arith.constant 0.000000e+00 : f32
    %2 = vector.broadcast %cst : f32 to vector<10x25x8xf32>
    %c0_3 = arith.constant 0 : index
    %c0_4 = arith.constant 0 : index
    %c0_5 = arith.constant 0 : index
    %3 = vector.load %arg9[%c0_3, %c0_4, %c0_5] : memref<10x25x8xf32, #tpu.memory_space<vmem>>, vector<10x25x8xf32>
    tpu.vector_store %arg9[%c0_3, %c0_4, %c0_5], %2 {strides = array<i32>} : memref<10x25x8xf32, #tpu.memory_space<vmem>>, vector<10x25x8xf32>,
    %c8_i32 = arith.constant 8 : i32
    %4 = arith.muli %arg2, %c8_i32 : i32
    %5 = tpu.assume_multiple %4, 8 : i32
    %c0_6 = arith.constant 0 : index
    %6 = arith.index_cast %5 : i32 to index
    %c0_7 = arith.constant 0 : index
    %c0_8 = arith.constant 0 : index
    %7 = vector.load %arg3[%c0_6, %6, %c0_7, %c0_8] : memref<1x16x16x4xf32, #tpu.memory_space<vmem>>, vector<1x8x16x4xf32>
    %8 = vector.shape_cast %7 : vector<1x8x16x4xf32> to vector<8x16x4xf32>
    %9 = vector.shape_cast %8 : vector<8x16x4xf32> to vector<128x4xf32>
    %cst_9 = arith.constant dense<0.000000e+00> : vector<128x8xf32>
    %10 = tpu.matmul %9, %0, %cst_9 {dimension_numbers = #tpu.dot_dimension_numbers<[1], [0], [0], [1], [0, 0, 1, 1], [], []>} : vector<128x4xf32>, vector<4x8xf32>, vector<128x8xf32> -> vector<128x8xf32>
    %11 = vector.broadcast %1 : vector<1x8xf32> to vector<128x8xf32>
    %12 = arith.addf %10, %11 : vector<128x8xf32>
    %13 = vector.shape_cast %12 : vector<128x8xf32> to vector<8x16x8xf32>
    %c1 = arith.constant 1 : index
    %c8 = arith.constant 8 : index
    %c0_10 = arith.constant 0 : index
    %14 = vector.load %arg9[%c1, %c8, %c0_10] : memref<10x25x8xf32, #tpu.memory_space<vmem>>, vector<8x16x8xf32>
    tpu.vector_store %arg9[%c1, %c8, %c0_10], %13 {strides = array<i32>} : memref<10x25x8xf32, #tpu.memory_space<vmem>>, vector<8x16x8xf32>,
    %c0_i32 = arith.constant 0 : i32
    %15 = arith.cmpi sgt, %arg2, %c0_i32 : i32
    %16 = arith.extui %15 : i1 to i32
    %c0_i32_11 = arith.constant 0 : i32
    %17 = arith.cmpi ne, %16, %c0_i32_11 : i32
    scf.if %17 {
      %c1_i32_46 = arith.constant 1 : i32
      %93 = arith.subi %5, %c1_i32_46 : i32
      %c0_47 = arith.constant 0 : index
      %94 = arith.index_cast %93 : i32 to index
      %c0_48 = arith.constant 0 : index
      %c0_49 = arith.constant 0 : index
      %95 = vector.load %arg3[%c0_47, %94, %c0_48, %c0_49] : memref<1x16x16x4xf32, #tpu.memory_space<vmem>>, vector<1x1x16x4xf32>
      %96 = vector.shape_cast %95 : vector<1x1x16x4xf32> to vector<1x16x4xf32>
      %97 = vector.shape_cast %96 : vector<1x16x4xf32> to vector<16x4xf32>
      %cst_50 = arith.constant dense<0.000000e+00> : vector<16x8xf32>
      %98 = tpu.matmul %97, %0, %cst_50 {dimension_numbers = #tpu.dot_dimension_numbers<[1], [0], [0], [1], [0, 0, 1, 1], [], []>} : vector<16x4xf32>, vector<4x8xf32>, vector<16x8xf32> -> vector<16x8xf32>
      %99 = vector.broadcast %1 : vector<1x8xf32> to vector<16x8xf32>
      %100 = arith.addf %98, %99 : vector<16x8xf32>
      %101 = vector.shape_cast %100 : vector<16x8xf32> to vector<1x16x8xf32>
      %c0_51 = arith.constant 0 : index
      %c8_52 = arith.constant 8 : index
      %c0_53 = arith.constant 0 : index
      %102 = vector.load %arg9[%c0_51, %c8_52, %c0_53] : memref<10x25x8xf32, #tpu.memory_space<vmem>>, vector<1x16x8xf32>
      tpu.vector_store %arg9[%c0_51, %c8_52, %c0_53], %101 {strides = array<i32>} : memref<10x25x8xf32, #tpu.memory_space<vmem>>, vector<1x16x8xf32>,
    } else {
    }
    %c1_i32 = arith.constant 1 : i32
    %18 = arith.cmpi slt, %arg2, %c1_i32 : i32
    %19 = arith.extui %18 : i1 to i32
    %c0_i32_12 = arith.constant 0 : i32
    %20 = arith.cmpi ne, %19, %c0_i32_12 : i32
    scf.if %20 {
      %c8_i32_46 = arith.constant 8 : i32
      %93 = arith.addi %5, %c8_i32_46 : i32
      %c0_47 = arith.constant 0 : index
      %94 = arith.index_cast %93 : i32 to index
      %c0_48 = arith.constant 0 : index
      %c0_49 = arith.constant 0 : index
      %95 = vector.load %arg3[%c0_47, %94, %c0_48, %c0_49] : memref<1x16x16x4xf32, #tpu.memory_space<vmem>>, vector<1x1x16x4xf32>
      %96 = vector.shape_cast %95 : vector<1x1x16x4xf32> to vector<1x16x4xf32>
      %97 = vector.shape_cast %96 : vector<1x16x4xf32> to vector<16x4xf32>
      %cst_50 = arith.constant dense<0.000000e+00> : vector<16x8xf32>
      %98 = tpu.matmul %97, %0, %cst_50 {dimension_numbers = #tpu.dot_dimension_numbers<[1], [0], [0], [1], [0, 0, 1, 1], [], []>} : vector<16x4xf32>, vector<4x8xf32>, vector<16x8xf32> -> vector<16x8xf32>
      %99 = vector.broadcast %1 : vector<1x8xf32> to vector<16x8xf32>
      %100 = arith.addf %98, %99 : vector<16x8xf32>
      %101 = vector.shape_cast %100 : vector<16x8xf32> to vector<1x16x8xf32>
      %c9_51 = arith.constant 9 : index
      %c8_52 = arith.constant 8 : index
      %c0_53 = arith.constant 0 : index
      %102 = vector.load %arg9[%c9_51, %c8_52, %c0_53] : memref<10x25x8xf32, #tpu.memory_space<vmem>>, vector<1x16x8xf32>
      tpu.vector_store %arg9[%c9_51, %c8_52, %c0_53], %101 {strides = array<i32>} : memref<10x25x8xf32, #tpu.memory_space<vmem>>, vector<1x16x8xf32>,
    } else {
    }
    %c0_13 = arith.constant 0 : index
    %c0_14 = arith.constant 0 : index
    %21 = vector.load %arg6[%c0_13, %c0_14] : memref<9x8xf32, #tpu.memory_space<vmem>>, vector<9x8xf32>
    %c0_15 = arith.constant 0 : index
    %c0_16 = arith.constant 0 : index
    %22 = vector.load %arg7[%c0_15, %c0_16] : memref<1x8xf32, #tpu.memory_space<vmem>>, vector<1x8xf32>
    %cst_17 = arith.constant 0.000000e+00 : f32
    %23 = vector.broadcast %cst_17 : f32 to vector<8x16x8xf32>
    %c0_18 = arith.constant 0 : index
    %c7 = arith.constant 7 : index
    %c0_19 = arith.constant 0 : index
    %24 = vector.load %arg9[%c0_18, %c7, %c0_19] : memref<10x25x8xf32, #tpu.memory_space<vmem>>, vector<8x16x8xf32>
    %25 = vector.extract_strided_slice %21 {offsets = [0, 0], sizes = [1, 8], strides = [1, 1]} : vector<9x8xf32> to vector<1x8xf32>
    %26 = vector.shape_cast %25 : vector<1x8xf32> to vector<8xf32>
    %27 = vector.shape_cast %26 : vector<8xf32> to vector<1x1x8xf32>
    %28 = vector.broadcast %27 : vector<1x1x8xf32> to vector<8x16x8xf32>
    %29 = arith.mulf %24, %28 : vector<8x16x8xf32>
    %30 = arith.addf %23, %29 : vector<8x16x8xf32>
    %c0_20 = arith.constant 0 : index
    %c8_21 = arith.constant 8 : index
    %c0_22 = arith.constant 0 : index
    %31 = vector.load %arg9[%c0_20, %c8_21, %c0_22] : memref<10x25x8xf32, #tpu.memory_space<vmem>>, vector<8x16x8xf32>
    %32 = vector.extract_strided_slice %21 {offsets = [1, 0], sizes = [1, 8], strides = [1, 1]} : vector<9x8xf32> to vector<1x8xf32>
    %33 = vector.shape_cast %32 : vector<1x8xf32> to vector<8xf32>
    %34 = vector.shape_cast %33 : vector<8xf32> to vector<1x1x8xf32>
    %35 = vector.broadcast %34 : vector<1x1x8xf32> to vector<8x16x8xf32>
    %36 = arith.mulf %31, %35 : vector<8x16x8xf32>
    %37 = arith.addf %30, %36 : vector<8x16x8xf32>
    %c0_23 = arith.constant 0 : index
    %c9 = arith.constant 9 : index
    %c0_24 = arith.constant 0 : index
    %38 = vector.load %arg9[%c0_23, %c9, %c0_24] : memref<10x25x8xf32, #tpu.memory_space<vmem>>, vector<8x16x8xf32>
    %39 = vector.extract_strided_slice %21 {offsets = [2, 0], sizes = [1, 8], strides = [1, 1]} : vector<9x8xf32> to vector<1x8xf32>
    %40 = vector.shape_cast %39 : vector<1x8xf32> to vector<8xf32>
    %41 = vector.shape_cast %40 : vector<8xf32> to vector<1x1x8xf32>
    %42 = vector.broadcast %41 : vector<1x1x8xf32> to vector<8x16x8xf32>
    %43 = arith.mulf %38, %42 : vector<8x16x8xf32>
    %44 = arith.addf %37, %43 : vector<8x16x8xf32>
    %c1_25 = arith.constant 1 : index
    %c7_26 = arith.constant 7 : index
    %c0_27 = arith.constant 0 : index
    %45 = vector.load %arg9[%c1_25, %c7_26, %c0_27] : memref<10x25x8xf32, #tpu.memory_space<vmem>>, vector<8x16x8xf32>
    %46 = vector.extract_strided_slice %21 {offsets = [3, 0], sizes = [1, 8], strides = [1, 1]} : vector<9x8xf32> to vector<1x8xf32>
    %47 = vector.shape_cast %46 : vector<1x8xf32> to vector<8xf32>
    %48 = vector.shape_cast %47 : vector<8xf32> to vector<1x1x8xf32>
    %49 = vector.broadcast %48 : vector<1x1x8xf32> to vector<8x16x8xf32>
    %50 = arith.mulf %45, %49 : vector<8x16x8xf32>
    %51 = arith.addf %44, %50 : vector<8x16x8xf32>
    %c1_28 = arith.constant 1 : index
    %c8_29 = arith.constant 8 : index
    %c0_30 = arith.constant 0 : index
    %52 = vector.load %arg9[%c1_28, %c8_29, %c0_30] : memref<10x25x8xf32, #tpu.memory_space<vmem>>, vector<8x16x8xf32>
    %53 = vector.extract_strided_slice %21 {offsets = [4, 0], sizes = [1, 8], strides = [1, 1]} : vector<9x8xf32> to vector<1x8xf32>
    %54 = vector.shape_cast %53 : vector<1x8xf32> to vector<8xf32>
    %55 = vector.shape_cast %54 : vector<8xf32> to vector<1x1x8xf32>
    %56 = vector.broadcast %55 : vector<1x1x8xf32> to vector<8x16x8xf32>
    %57 = arith.mulf %52, %56 : vector<8x16x8xf32>
    %58 = arith.addf %51, %57 : vector<8x16x8xf32>
    %c1_31 = arith.constant 1 : index
    %c9_32 = arith.constant 9 : index
    %c0_33 = arith.constant 0 : index
    %59 = vector.load %arg9[%c1_31, %c9_32, %c0_33] : memref<10x25x8xf32, #tpu.memory_space<vmem>>, vector<8x16x8xf32>
    %60 = vector.extract_strided_slice %21 {offsets = [5, 0], sizes = [1, 8], strides = [1, 1]} : vector<9x8xf32> to vector<1x8xf32>
    %61 = vector.shape_cast %60 : vector<1x8xf32> to vector<8xf32>
    %62 = vector.shape_cast %61 : vector<8xf32> to vector<1x1x8xf32>
    %63 = vector.broadcast %62 : vector<1x1x8xf32> to vector<8x16x8xf32>
    %64 = arith.mulf %59, %63 : vector<8x16x8xf32>
    %65 = arith.addf %58, %64 : vector<8x16x8xf32>
    %c2 = arith.constant 2 : index
    %c7_34 = arith.constant 7 : index
    %c0_35 = arith.constant 0 : index
    %66 = vector.load %arg9[%c2, %c7_34, %c0_35] : memref<10x25x8xf32, #tpu.memory_space<vmem>>, vector<8x16x8xf32>
    %67 = vector.extract_strided_slice %21 {offsets = [6, 0], sizes = [1, 8], strides = [1, 1]} : vector<9x8xf32> to vector<1x8xf32>
    %68 = vector.shape_cast %67 : vector<1x8xf32> to vector<8xf32>
    %69 = vector.shape_cast %68 : vector<8xf32> to vector<1x1x8xf32>
    %70 = vector.broadcast %69 : vector<1x1x8xf32> to vector<8x16x8xf32>
    %71 = arith.mulf %66, %70 : vector<8x16x8xf32>
    %72 = arith.addf %65, %71 : vector<8x16x8xf32>
    %c2_36 = arith.constant 2 : index
    %c8_37 = arith.constant 8 : index
    %c0_38 = arith.constant 0 : index
    %73 = vector.load %arg9[%c2_36, %c8_37, %c0_38] : memref<10x25x8xf32, #tpu.memory_space<vmem>>, vector<8x16x8xf32>
    %74 = vector.extract_strided_slice %21 {offsets = [7, 0], sizes = [1, 8], strides = [1, 1]} : vector<9x8xf32> to vector<1x8xf32>
    %75 = vector.shape_cast %74 : vector<1x8xf32> to vector<8xf32>
    %76 = vector.shape_cast %75 : vector<8xf32> to vector<1x1x8xf32>
    %77 = vector.broadcast %76 : vector<1x1x8xf32> to vector<8x16x8xf32>
    %78 = arith.mulf %73, %77 : vector<8x16x8xf32>
    %79 = arith.addf %72, %78 : vector<8x16x8xf32>
    %c2_39 = arith.constant 2 : index
    %c9_40 = arith.constant 9 : index
    %c0_41 = arith.constant 0 : index
    %80 = vector.load %arg9[%c2_39, %c9_40, %c0_41] : memref<10x25x8xf32, #tpu.memory_space<vmem>>, vector<8x16x8xf32>
    %81 = vector.extract_strided_slice %21 {offsets = [8, 0], sizes = [1, 8], strides = [1, 1]} : vector<9x8xf32> to vector<1x8xf32>
    %82 = vector.shape_cast %81 : vector<1x8xf32> to vector<8xf32>
    %83 = vector.shape_cast %82 : vector<8xf32> to vector<1x1x8xf32>
    %84 = vector.broadcast %83 : vector<1x1x8xf32> to vector<8x16x8xf32>
    %85 = arith.mulf %80, %84 : vector<8x16x8xf32>
    %86 = arith.addf %79, %85 : vector<8x16x8xf32>
    %87 = vector.shape_cast %22 : vector<1x8xf32> to vector<1x1x8xf32>
    %88 = vector.broadcast %87 : vector<1x1x8xf32> to vector<8x16x8xf32>
    %89 = arith.addf %86, %88 : vector<8x16x8xf32>
    %c0_42 = arith.constant 0 : index
    %c0_43 = arith.constant 0 : index
    %c0_44 = arith.constant 0 : index
    %c0_45 = arith.constant 0 : index
    %90 = vector.load %arg8[%c0_42, %c0_43, %c0_44, %c0_45] : memref<1x8x16x8xf32, #tpu.memory_space<vmem>>, vector<1x8x16x8xf32>
    %91 = vector.shape_cast %90 : vector<1x8x16x8xf32> to vector<8x16x8xf32>
    %92 = vector.shape_cast %89 : vector<8x16x8xf32> to vector<1x8x16x8xf32>
    tpu.vector_store %arg8[%c0_42, %c0_43, %c0_44, %c0_45], %92 {strides = array<i32>} : memref<1x8x16x8xf32, #tpu.memory_space<vmem>>, vector<1x8x16x8xf32>,
    return
  }
  func.func @transform_0(%arg0: i32, %arg1: i32, %arg2: i32) -> (i32, i32, i32, i32) {
    %c0_i32 = arith.constant 0 : i32
    %c0_i32_0 = arith.constant 0 : i32
    %c0_i32_1 = arith.constant 0 : i32
    %c0_i32_2 = arith.constant 0 : i32
    return %arg0, %c0_i32, %c0_i32_0, %c0_i32_1 : i32, i32, i32, i32
  }
  func.func @transform_1(%arg0: i32, %arg1: i32, %arg2: i32) -> (i32, i32) {
    %c0_i32 = arith.constant 0 : i32
    %c0_i32_0 = arith.constant 0 : i32
    return %c0_i32, %arg1 : i32, i32
  }
  func.func @transform_2(%arg0: i32, %arg1: i32, %arg2: i32) -> (i32, i32) {
    %c0_i32 = arith.constant 0 : i32
    %c0_i32_0 = arith.constant 0 : i32
    return %c0_i32, %arg1 : i32, i32
  }
  func.func @transform_3(%arg0: i32, %arg1: i32, %arg2: i32) -> (i32, i32) {
    %c0_i32 = arith.constant 0 : i32
    %c0_i32_0 = arith.constant 0 : i32
    return %c0_i32, %arg1 : i32, i32
  }
  func.func @transform_4(%arg0: i32, %arg1: i32, %arg2: i32) -> (i32, i32) {
    %c0_i32 = arith.constant 0 : i32
    %c0_i32_0 = arith.constant 0 : i32
    return %c0_i32, %arg1 : i32, i32
  }
  func.func @transform_5(%arg0: i32, %arg1: i32, %arg2: i32) -> (i32, i32, i32, i32) {
    %c0_i32 = arith.constant 0 : i32
    %c0_i32_0 = arith.constant 0 : i32
    return %arg0, %arg2, %c0_i32, %arg1 : i32, i32, i32, i32
  }
}

</mosaic_0001>

<llo_original>
// kernel: tpu_custom_call.1
$region0: #{tpu_custom_call.1}
  #allocation0 [shape = 'u32[]', space=smem, size = 0x4, offset = 0x4, fixed_abs, tag = 'smem constant byte address 0x4 - core index']
  #allocation1 [shape = 'u32[72,128]{1,0:T(1,128)}', space=vmem, size = 0x9000, scoped, tag = 'internal scratch']
  #allocation2 [shape = 'f32[10,25,8]{2,1,0:T(8,128)}', space=vmem, size = 0x28000, scoped, tag = 'scratch operand']
  %s0 = inlined_call_operand.vmem [shape: f32[2,16,16,4], index: 0, kind: input, shape index: {}]
  %s1 = inlined_call_operand.vmem [shape: f32[4,8], index: 1, kind: input, shape index: {}]
  %s2 = inlined_call_operand.vmem [shape: f32[1,8], index: 2, kind: input, shape index: {}]
  %s3 = inlined_call_operand.vmem [shape: f32[9,8], index: 3, kind: input, shape index: {}]
  %s4 = inlined_call_operand.vmem [shape: f32[1,8], index: 4, kind: input, shape index: {}]
  %s5 = inlined_call_operand.vmem [shape: f32[2,16,16,8], index: 5, kind: output, shape index: {}]
  %s6 = sld [smem:[#allocation0]]
  $region61: #{tpu_custom_call.1} parent=0
    _
  %s8 = ssub.s32 1, %s6
  %s9 = scalar_select 0, %s8, %s6
  loop: start=0, step=1, limit=6
  $region2: #{tpu_custom_call.1} parent=0 // loop_pre_header
    _
  $region3: #{tpu_custom_call.1} parent=0 // loop_header
    %s11 = sphi 0, %s15
    %p12 = scmp.ge.s32.totalorder %s11, 6
    %s18 = sphi 0, %s37
    %s19 = sphi 0, %s33
    %s20 = sphi 0, %s29
    %s21 = sphi 0, %s18
    %s22 = sphi 0, %s19
    %s23 = sphi 0, %s20
    %s24 = sphi 0, %s21
    %s25 = sphi 0, %s22
    %s26 = sphi 0, %s23
    %s40 = sphi 0, %s42
    %s43 = sphi 0, %s40
    %s44 = sphi 0, %s43
    %s60 = sphi 0, %s44
    %s66 = sphi 0, %s68
    %s69 = sphi 0, %s66
    %s70 = sphi 0, %s69
    %s86 = sphi 0, %s70
    %s92 = sphi 0, %s94
    %s95 = sphi 0, %s92
    %s96 = sphi 0, %s95
    %s112 = sphi 0, %s96
    %s118 = sphi 0, %s120
    %s121 = sphi 0, %s118
    %s122 = sphi 0, %s121
    %s138 = sphi 0, %s122
    %s144 = sphi 0, %s146
    %s147 = sphi 0, %s144
    %s148 = sphi 0, %s147
    %s164 = sphi 0, %s148
    %s174 = sphi 0, %s176
    %s177 = sphi 0, %s174
    %s178 = sphi 0, %s177
    %s194 = sphi 0, %s178
  $region4: #{tpu_custom_call.1} parent=0 // loop_header_branch
    %14 = sbr.rel (%p12) target = $region8
  $region5: #{tpu_custom_call.1} parent=0 // loop_body
    %s16 = ssub.s32 %s11, 1
    %s17 = ssub.s32 %s11, 2
    %s27 = sadd.s32 1, %s20
    %p28 = scmp.ge.s32.totalorder %s27, 2
    %s29 = scalar_select %p28, 0, %s27
    %s30 = sadd.s32 1, %s19
    %s31 = scalar_select %p28, %s30, %s19
    %p32 = scmp.ge.s32.totalorder %s31, 1
    %s33 = scalar_select %p32, 0, %s31
    %s34 = sadd.s32 1, %s18
    %s35 = scalar_select %p32, %s34, %s18
    %p36 = scmp.ge.s32.totalorder %s35, 2
    %s37 = scalar_select %p36, 0, %s35
    %s38 = ssub.s32 %s18, %s37
    %p39 = scmp.eq.s32.totalorder %s38, 0
    %s41 = sadd.s32 %s40, 1
    %s42 = scalar_select %p39, %s40, %s41
    %p45 = pneg %p39
    %p46 = scmp.eq.s32.totalorder %s11, 3
    %p47 = por %p45, %p46
    %p48 = scmp.ne.s32.totalorder %s40, %s43
    %p49 = scmp.eq.s32.totalorder %s11, 0
    %p50 = por %p48, %p49
    %p51 = scmp.ne.s32.totalorder %s40, %s43
    %p52 = scmp.eq.s32.totalorder %s16, 3
    %p53 = por %p51, %p52
    %p54 = scmp.ne.s32.totalorder %s43, %s44
    %p55 = scmp.eq.s32.totalorder %s16, 0
    %p56 = por %p54, %p55
    %p57 = scmp.ne.s32.totalorder %s43, %s44
    %p58 = scmp.eq.s32.totalorder %s17, 3
    %p59 = por %p57, %p58
    %p61 = scmp.ne.s32.totalorder %s44, %s60
    %p62 = scmp.eq.s32.totalorder %s17, 0
    %p63 = por %p61, %p62
    %s64 = ssub.s32 %s19, %s33
    %p65 = scmp.eq.s32.totalorder %s64, 0
    %s67 = sadd.s32 %s66, 1
    %s68 = scalar_select %p65, %s66, %s67
    %p71 = pneg %p65
    %p72 = scmp.eq.s32.totalorder %s11, 3
    %p73 = por %p71, %p72
    %p74 = scmp.ne.s32.totalorder %s66, %s69
    %p75 = scmp.eq.s32.totalorder %s11, 0
    %p76 = por %p74, %p75
    %p77 = scmp.ne.s32.totalorder %s66, %s69
    %p78 = scmp.eq.s32.totalorder %s16, 3
    %p79 = por %p77, %p78
    %p80 = scmp.ne.s32.totalorder %s69, %s70
    %p81 = scmp.eq.s32.totalorder %s16, 0
    %p82 = por %p80, %p81
    %p83 = scmp.ne.s32.totalorder %s69, %s70
    %p84 = scmp.eq.s32.totalorder %s17, 3
    %p85 = por %p83, %p84
    %p87 = scmp.ne.s32.totalorder %s70, %s86
    %p88 = scmp.eq.s32.totalorder %s17, 0
    %p89 = por %p87, %p88
    %s90 = ssub.s32 %s19, %s33
    %p91 = scmp.eq.s32.totalorder %s90, 0
    %s93 = sadd.s32 %s92, 1
    %s94 = scalar_select %p91, %s92, %s93
    %p97 = pneg %p91
    %p98 = scmp.eq.s32.totalorder %s11, 3
    %p99 = por %p97, %p98
    %p100 = scmp.ne.s32.totalorder %s92, %s95
    %p101 = scmp.eq.s32.totalorder %s11, 0
    %p102 = por %p100, %p101
    %p103 = scmp.ne.s32.totalorder %s92, %s95
    %p104 = scmp.eq.s32.totalorder %s16, 3
    %p105 = por %p103, %p104
    %p106 = scmp.ne.s32.totalorder %s95, %s96
    %p107 = scmp.eq.s32.totalorder %s16, 0
    %p108 = por %p106, %p107
    %p109 = scmp.ne.s32.totalorder %s95, %s96
    %p110 = scmp.eq.s32.totalorder %s17, 3
    %p111 = por %p109, %p110
    %p113 = scmp.ne.s32.totalorder %s96, %s112
    %p114 = scmp.eq.s32.totalorder %s17, 0
    %p115 = por %p113, %p114
    %s116 = ssub.s32 %s19, %s33
    %p117 = scmp.eq.s32.totalorder %s116, 0
    %s119 = sadd.s32 %s118, 1
    %s120 = scalar_select %p117, %s118, %s119
    %p123 = pneg %p117
    %p124 = scmp.eq.s32.totalorder %s11, 3
    %p125 = por %p123, %p124
    %p126 = scmp.ne.s32.totalorder %s118, %s121
    %p127 = scmp.eq.s32.totalorder %s11, 0
    %p128 = por %p126, %p127
    %p129 = scmp.ne.s32.totalorder %s118, %s121
    %p130 = scmp.eq.s32.totalorder %s16, 3
    %p131 = por %p129, %p130
    %p132 = scmp.ne.s32.totalorder %s121, %s122
    %p133 = scmp.eq.s32.totalorder %s16, 0
    %p134 = por %p132, %p133
    %p135 = scmp.ne.s32.totalorder %s121, %s122
    %p136 = scmp.eq.s32.totalorder %s17, 3
    %p137 = por %p135, %p136
    %p139 = scmp.ne.s32.totalorder %s122, %s138
    %p140 = scmp.eq.s32.totalorder %s17, 0
    %p141 = por %p139, %p140
    %s142 = ssub.s32 %s19, %s33
    %p143 = scmp.eq.s32.totalorder %s142, 0
    %s145 = sadd.s32 %s144, 1
    %s146 = scalar_select %p143, %s144, %s145
    %p149 = pneg %p143
    %p150 = scmp.eq.s32.totalorder %s11, 3
    %p151 = por %p149, %p150
    %p152 = scmp.ne.s32.totalorder %s144, %s147
    %p153 = scmp.eq.s32.totalorder %s11, 0
    %p154 = por %p152, %p153
    %p155 = scmp.ne.s32.totalorder %s144, %s147
    %p156 = scmp.eq.s32.totalorder %s16, 3
    %p157 = por %p155, %p156
    %p158 = scmp.ne.s32.totalorder %s147, %s148
    %p159 = scmp.eq.s32.totalorder %s16, 0
    %p160 = por %p158, %p159
    %p161 = scmp.ne.s32.totalorder %s147, %s148
    %p162 = scmp.eq.s32.totalorder %s17, 3
    %p163 = por %p161, %p162
    %p165 = scmp.ne.s32.totalorder %s148, %s164
    %p166 = scmp.eq.s32.totalorder %s17, 0
    %p167 = por %p165, %p166
    %s168 = ssub.s32 %s18, %s37
    %s169 = ssub.s32 %s20, %s29
    %s170 = sor.u32 %s168, %s169
    %s171 = ssub.s32 %s19, %s33
    %s172 = sor.u32 %s170, %s171
    %p173 = scmp.eq.s32.totalorder %s172, 0
    %s175 = sadd.s32 %s174, 1
    %s176 = scalar_select %p173, %s174, %s175
    %p179 = pneg %p173
    %p180 = scmp.eq.s32.totalorder %s11, 3
    %p181 = por %p179, %p180
    %p182 = scmp.ne.s32.totalorder %s174, %s177
    %p183 = scmp.eq.s32.totalorder %s11, 0
    %p184 = por %p182, %p183
    %p185 = scmp.ne.s32.totalorder %s174, %s177
    %p186 = scmp.eq.s32.totalorder %s16, 3
    %p187 = por %p185, %p186
    %p188 = scmp.ne.s32.totalorder %s177, %s178
    %p189 = scmp.eq.s32.totalorder %s16, 0
    %p190 = por %p188, %p189
    %p191 = scmp.ne.s32.totalorder %s177, %s178
    %p192 = scmp.eq.s32.totalorder %s17, 3
    %p193 = por %p191, %p192
    %p195 = scmp.ne.s32.totalorder %s178, %s194
    %p196 = scmp.eq.s32.totalorder %s17, 0
    %p197 = por %p195, %p196
    %p198 = scmp.le.s32.totalorder 1, %s11
    %p199 = scmp.lt.s32.totalorder %s11, 5
    %p200 = pnand %p198, %p199
    %p201 = pneg %p200
    // Predicated region
    $region9: #{tpu_custom_call.1} parent=5 // pred_check
      _
    $region10: #{tpu_custom_call.1} parent=5 // pred_check_branch
      %203 = sbr.rel (%p200) target = $region12
    $region11: #{tpu_custom_call.1} parent=5 // pred_region
      %s204 = ssub.s32 %s11, 1
      // Predicated region
      $region13: #{tpu_custom_call.1} parent=11 // pred_check
        %p205 = pneg %p82
      $region14: #{tpu_custom_call.1} parent=11 // pred_check_branch
        %207 = sbr.rel (%p205) target = $region16
      $region15: #{tpu_custom_call.1} parent=11 // pred_region
        %p208 = scmp.lt.s32.totalorder %s22, 0
        %s209 = scalar_select %p208, %s22, 0
        %s210 = smul.addr %s209, 4
        %s211 = scalar_lea.vmem %s1, %s210
      $region16: #{tpu_custom_call.1} parent=11 // pred_fallthru
        _
      // Predicated region
      $region17: #{tpu_custom_call.1} parent=11 // pred_check
        %p212 = pneg %p108
      $region18: #{tpu_custom_call.1} parent=11 // pred_check_branch
        %214 = sbr.rel (%p212) target = $region20
      $region19: #{tpu_custom_call.1} parent=11 // pred_region
        %p215 = scmp.lt.s32.totalorder %s22, 0
        %s216 = scalar_select %p215, %s22, 0
        %s217 = scalar_lea.vmem %s2, %s216
      $region20: #{tpu_custom_call.1} parent=11 // pred_fallthru
        _
      // Predicated region
      $region21: #{tpu_custom_call.1} parent=11 // pred_check
        %p218 = pneg %p134
      $region22: #{tpu_custom_call.1} parent=11 // pred_check_branch
        %220 = sbr.rel (%p218) target = $region24
      $region23: #{tpu_custom_call.1} parent=11 // pred_region
        %p221 = scmp.lt.s32.totalorder %s22, 0
        %s222 = scalar_select %p221, %s22, 0
        %s223 = smul.addr %s222, 8
        %s224 = scalar_lea.vmem %s3, %s223
      $region24: #{tpu_custom_call.1} parent=11 // pred_fallthru
        _
      // Predicated region
      $region25: #{tpu_custom_call.1} parent=11 // pred_check
        %p225 = pneg %p160
      $region26: #{tpu_custom_call.1} parent=11 // pred_check_branch
        %227 = sbr.rel (%p225) target = $region28
      $region27: #{tpu_custom_call.1} parent=11 // pred_region
        %p228 = scmp.lt.s32.totalorder %s22, 0
        %s229 = scalar_select %p228, %s22, 0
        %s230 = scalar_lea.vmem %s4, %s229
      $region28: #{tpu_custom_call.1} parent=11 // pred_fallthru
        _
    $region12: #{tpu_custom_call.1} parent=5 // pred_fallthru
      _
    %p231 = scmp.lt.s32.totalorder %s11, 4
    // Predicated region
    $region29: #{tpu_custom_call.1} parent=5 // pred_check
      %p232 = pneg %p231
    $region30: #{tpu_custom_call.1} parent=5 // pred_check_branch
      %234 = sbr.rel (%p232) target = $region32
    $region31: #{tpu_custom_call.1} parent=5 // pred_region
      // Predicated region
      $region33: #{tpu_custom_call.1} parent=31 // pred_check
        %p235 = pneg %p50
      $region34: #{tpu_custom_call.1} parent=31 // pred_check_branch
        %237 = sbr.rel (%p235) target = $region36
      $region35: #{tpu_custom_call.1} parent=31 // pred_region
        %p238 = scmp.lt.s32.totalorder %s18, 1
        %s239 = scalar_select %p238, %s18, 1
        %s240 = smul.addr %s239, 32
        %s241 = smul.addr %s240, 8
        %s242 = scalar_lea.vmem %s0, %s241
      $region36: #{tpu_custom_call.1} parent=31 // pred_fallthru
        _
    $region32: #{tpu_custom_call.1} parent=5 // pred_fallthru
      _
    %p243 = scmp.le.s32.totalorder 1, %s11
    %p244 = scmp.lt.s32.totalorder %s11, 5
    %p245 = pnand %p243, %p244
    %p246 = pneg %p245
    // Predicated region
    $region37: #{tpu_custom_call.1} parent=5 // pred_check
      _
    $region38: #{tpu_custom_call.1} parent=5 // pred_check_branch
      %248 = sbr.rel (%p245) target = $region40
    $region39: #{tpu_custom_call.1} parent=5 // pred_region
      %s249 = ssub.s32 %s11, 1
      %p250 = scmp.lt.s32.totalorder %s21, 1
      %s251 = scalar_select %p250, %s21, 1
      %s252 = smul.addr %s251, 32
      %s253 = smul.addr %s252, 8
      %s254 = scalar_lea.vmem %s0, %s253
      %p255 = pneg %p56
      %p256 = pneg %p53
      %p257 = scmp.lt.s32.totalorder %s22, 0
      %s258 = scalar_select %p257, %s22, 0
      %s259 = smul.addr %s258, 4
      %s260 = scalar_lea.vmem %s1, %s259
      %p261 = pneg %p82
      %p262 = pneg %p79
      %p263 = scmp.lt.s32.totalorder %s22, 0
      %s264 = scalar_select %p263, %s22, 0
      %s265 = scalar_lea.vmem %s2, %s264
      %p266 = pneg %p108
      %p267 = pneg %p105
      %p268 = scmp.lt.s32.totalorder %s22, 0
      %s269 = scalar_select %p268, %s22, 0
      %s270 = smul.addr %s269, 8
      %s271 = scalar_lea.vmem %s3, %s270
      %p272 = pneg %p134
      %p273 = pneg %p131
      %p274 = scmp.lt.s32.totalorder %s22, 0
      %s275 = scalar_select %p274, %s22, 0
      %s276 = scalar_lea.vmem %s4, %s275
      %p277 = pneg %p160
      %p278 = pneg %p157
      %p279 = pneg %p190
      %p280 = pneg %p187
      %s281 = smul.u32 8, %s23
      %p282 = scmp.lt.s32.totalorder %s21, 1
      %s283 = scalar_select %p282, %s21, 1
      %p284 = scmp.lt.s32.totalorder %s281, 15
      %s285 = scalar_select %p284, %s281, 15
      %p286 = scmp.lt.s32.totalorder %s22, 0
      %s287 = scalar_select %p286, %s22, 0
      %s288 = smul.addr %s285, 2
      %s289 = sadd.s32 %s287, %s288
      %s290 = smul.addr %s283, 32
      %s291 = sadd.s32 %s289, %s290
      %s292 = smul.addr %s291, 8
      %s293 = scalar_lea.vmem %s5, %s292
      %p294 = scmp.lt.s32.totalorder %s21, 1
      %s295 = scalar_select %p294, %s21, 1
      %s296 = smul.addr %s295, 32
      %s297 = smul.addr %s296, 8
      %s298 = scalar_lea.vmem %s0, %s297
      %p299 = scmp.lt.s32.totalorder %s22, 0
      %s300 = scalar_select %p299, %s22, 0
      %s301 = smul.addr %s300, 4
      %s302 = scalar_lea.vmem %s1, %s301
      %p303 = scmp.lt.s32.totalorder %s22, 0
      %s304 = scalar_select %p303, %s22, 0
      %s305 = scalar_lea.vmem %s2, %s304
      %p306 = scmp.lt.s32.totalorder %s22, 0
      %s307 = scalar_select %p306, %s22, 0
      %s308 = smul.addr %s307, 8
      %s309 = scalar_lea.vmem %s3, %s308
      %p310 = scmp.lt.s32.totalorder %s22, 0
      %s311 = scalar_select %p310, %s22, 0
      %s312 = scalar_lea.vmem %s4, %s311
      %s313 = smul.u32 8, %s23
      %p314 = scmp.lt.s32.totalorder %s21, 1
      %s315 = scalar_select %p314, %s21, 1
      %p316 = scmp.lt.s32.totalorder %s313, 15
      %s317 = scalar_select %p316, %s313, 15
      %p318 = scmp.lt.s32.totalorder %s22, 0
      %s319 = scalar_select %p318, %s22, 0
      %s320 = smul.addr %s317, 2
      %s321 = sadd.s32 %s319, %s320
      %s322 = smul.addr %s315, 32
      %s323 = sadd.s32 %s321, %s322
      %s324 = smul.addr %s323, 8
      %s325 = scalar_lea.vmem %s5, %s324
      %s326 = smul.u32 8, %s23
      %v327 = vld [vmem:[%s302] sm:$0xf]
      %v328 = vld [vmem:[%s305] sm:$0x1]
      %vm329 = vcmask 64512
      %330 = vst.msk [vmem:[#allocation2] sm:$0xff] %vm329, 0.0
      %331 = vst.msk [vmem:[#allocation2 + $0x8] sm:$0xff] %vm329, 0.0
      %332 = vst.msk [vmem:[#allocation2 + $0x10] sm:$0xff] %vm329, 0.0
      %vm333 = vcmask 57344
      %334 = vst.msk [vmem:[#allocation2 + $0x18] sm:$0x1] %vm333, 0.0
      %335 = vst.msk [vmem:[#allocation2 + $0x20] sm:$0xff] %vm329, 0.0
      %336 = vst.msk [vmem:[#allocation2 + $0x28] sm:$0xff] %vm329, 0.0
      %337 = vst.msk [vmem:[#allocation2 + $0x30] sm:$0xff] %vm329, 0.0
      %338 = vst.msk [vmem:[#allocation2 + $0x38] sm:$0x1] %vm333, 0.0
      %339 = vst.msk [vmem:[#allocation2 + $0x40] sm:$0xff] %vm329, 0.0
      %340 = vst.msk [vmem:[#allocation2 + $0x48] sm:$0xff] %vm329, 0.0
      %341 = vst.msk [vmem:[#allocation2 + $0x50] sm:$0xff] %vm329, 0.0
      %342 = vst.msk [vmem:[#allocation2 + $0x58] sm:$0x1] %vm333, 0.0
      %343 = vst.msk [vmem:[#allocation2 + $0x60] sm:$0xff] %vm329, 0.0
      %344 = vst.msk [vmem:[#allocation2 + $0x68] sm:$0xff] %vm329, 0.0
      %345 = vst.msk [vmem:[#allocation2 + $0x70] sm:$0xff] %vm329, 0.0
      %346 = vst.msk [vmem:[#allocation2 + $0x78] sm:$0x1] %vm333, 0.0
      %347 = vst.msk [vmem:[#allocation2 + $0x80] sm:$0xff] %vm329, 0.0
      %348 = vst.msk [vmem:[#allocation2 + $0x88] sm:$0xff] %vm329, 0.0
      %349 = vst.msk [vmem:[#allocation2 + $0x90] sm:$0xff] %vm329, 0.0
      %350 = vst.msk [vmem:[#allocation2 + $0x98] sm:$0x1] %vm333, 0.0
      %351 = vst.msk [vmem:[#allocation2 + $0xa0] sm:$0xff] %vm329, 0.0
      %352 = vst.msk [vmem:[#allocation2 + $0xa8] sm:$0xff] %vm329, 0.0
      %353 = vst.msk [vmem:[#allocation2 + $0xb0] sm:$0xff] %vm329, 0.0
      %354 = vst.msk [vmem:[#allocation2 + $0xb8] sm:$0x1] %vm333, 0.0
      %355 = vst.msk [vmem:[#allocation2 + $0xc0] sm:$0xff] %vm329, 0.0
      %356 = vst.msk [vmem:[#allocation2 + $0xc8] sm:$0xff] %vm329, 0.0
      %357 = vst.msk [vmem:[#allocation2 + $0xd0] sm:$0xff] %vm329, 0.0
      %358 = vst.msk [vmem:[#allocation2 + $0xd8] sm:$0x1] %vm333, 0.0
      %359 = vst.msk [vmem:[#allocation2 + $0xe0] sm:$0xff] %vm329, 0.0
      %360 = vst.msk [vmem:[#allocation2 + $0xe8] sm:$0xff] %vm329, 0.0
      %361 = vst.msk [vmem:[#allocation2 + $0xf0] sm:$0xff] %vm329, 0.0
      %362 = vst.msk [vmem:[#allocation2 + $0xf8] sm:$0x1] %vm333, 0.0
      %363 = vst.msk [vmem:[#allocation2 + $0x100] sm:$0xff] %vm329, 0.0
      %364 = vst.msk [vmem:[#allocation2 + $0x108] sm:$0xff] %vm329, 0.0
      %365 = vst.msk [vmem:[#allocation2 + $0x110] sm:$0xff] %vm329, 0.0
      %366 = vst.msk [vmem:[#allocation2 + $0x118] sm:$0x1] %vm333, 0.0
      %367 = vst.msk [vmem:[#allocation2 + $0x120] sm:$0xff] %vm329, 0.0
      %368 = vst.msk [vmem:[#allocation2 + $0x128] sm:$0xff] %vm329, 0.0
      %369 = vst.msk [vmem:[#allocation2 + $0x130] sm:$0xff] %vm329, 0.0
      %370 = vst.msk [vmem:[#allocation2 + $0x138] sm:$0x1] %vm333, 0.0
      %s371 = smul.u32 %s23, 8
      %s372 = smul.u32 %s371, 16
      %s373 = scalar_lea.vmem %s298, %s372
      %v374 = vld [vmem:[%s373] sm:$0xff]
      %v375 = vld [vmem:[%s373 + $0x8] sm:$0xff]
      %v376 = vld [vmem:[%s373 + $0x10] sm:$0xff]
      %v377 = vld [vmem:[%s373 + $0x18] sm:$0xff]
      %v378 = vld [vmem:[%s373 + $0x20] sm:$0xff]
      %v379 = vld [vmem:[%s373 + $0x28] sm:$0xff]
      %v380 = vld [vmem:[%s373 + $0x30] sm:$0xff]
      %v381 = vld [vmem:[%s373 + $0x38] sm:$0xff]
      %v382 = vld [vmem:[%s373 + $0x40] sm:$0xff]
      %v383 = vld [vmem:[%s373 + $0x48] sm:$0xff]
      %v384 = vld [vmem:[%s373 + $0x50] sm:$0xff]
      %v385 = vld [vmem:[%s373 + $0x58] sm:$0xff]
      %v386 = vld [vmem:[%s373 + $0x60] sm:$0xff]
      %v387 = vld [vmem:[%s373 + $0x68] sm:$0xff]
      %v388 = vld [vmem:[%s373 + $0x70] sm:$0xff]
      %v389 = vld [vmem:[%s373 + $0x78] sm:$0xff]
      %v391 = vperm.slane %v328, 0
      %vm393 = vcmask 31744
      %v395 = vsel %vm393, %v374, 0
      %v398 = vsel %vm393, %v375, 0
      %v401 = vsel %vm393, %v376, 0
      %v404 = vsel %vm393, %v377, 0
      %v407 = vsel %vm393, %v378, 0
      %v410 = vsel %vm393, %v379, 0
      %v413 = vsel %vm393, %v380, 0
      %v416 = vsel %vm393, %v381, 0
      %v419 = vsel %vm393, %v382, 0
      %v422 = vsel %vm393, %v383, 0
      %v425 = vsel %vm393, %v384, 0
      %v428 = vsel %vm393, %v385, 0
      %v431 = vsel %vm393, %v386, 0
      %v434 = vsel %vm393, %v387, 0
      %v437 = vsel %vm393, %v388, 0
      %v440 = vsel %vm393, %v389, 0
      %vm442 = vcmask 1043456
      %v444 = vsel %vm442, %v327, 0
      %446 = vmatpush.msra.mxu0 0.0
      %447 = vmatpush.msra.mxu0 0.0
      %448 = vmatpush.msra.mxu0 0.0
      %449 = vmatpush.msra.mxu0 0.0
      %450 = vmatpush.msra.mxu0 0.0
      %451 = vmatpush.msra.mxu0 0.0
      %452 = vmatpush.msra.mxu0 0.0
      %453 = vmatpush.msra.mxu0 0.0
      %454 = vmatpush.msra.mxu0 0.0
      %455 = vmatpush.msra.mxu0 0.0
      %456 = vmatpush.msra.mxu0 0.0
      %457 = vmatpush.msra.mxu0 0.0
      %458 = vmatpush.msra.mxu0 0.0
      %459 = vmatpush.msra.mxu0 0.0
      %460 = vmatpush.msra.mxu0 0.0
      %461 = vmatpush.msra.mxu0 %v444
      %462 = vmatmul.f32.gmra.mxu0 %v395
      %v463 = vpop.f32.mrf.mxu0
      %v464 = vadd.f32 %v391, %v463
      %465 = vmatmul.f32.gmra.mxu0 %v398
      %v466 = vpop.f32.mrf.mxu0
      %v467 = vadd.f32 %v391, %v466
      %468 = vmatmul.f32.gmra.mxu0 %v401
      %v469 = vpop.f32.mrf.mxu0
      %v470 = vadd.f32 %v391, %v469
      %471 = vmatmul.f32.gmra.mxu0 %v404
      %v472 = vpop.f32.mrf.mxu0
      %v473 = vadd.f32 %v391, %v472
      %474 = vmatmul.f32.gmra.mxu0 %v407
      %v475 = vpop.f32.mrf.mxu0
      %v476 = vadd.f32 %v391, %v475
      %477 = vmatmul.f32.gmra.mxu0 %v410
      %v478 = vpop.f32.mrf.mxu0
      %v479 = vadd.f32 %v391, %v478
      %480 = vmatmul.f32.gmra.mxu0 %v413
      %v481 = vpop.f32.mrf.mxu0
      %v482 = vadd.f32 %v391, %v481
      %483 = vmatmul.f32.gmra.mxu0 %v416
      %v484 = vpop.f32.mrf.mxu0
      %v485 = vadd.f32 %v391, %v484
      %486 = vmatmul.f32.gmra.mxu0 %v419
      %v487 = vpop.f32.mrf.mxu0
      %v488 = vadd.f32 %v391, %v487
      %489 = vmatmul.f32.gmra.mxu0 %v422
      %v490 = vpop.f32.mrf.mxu0
      %v491 = vadd.f32 %v391, %v490
      %492 = vmatmul.f32.gmra.mxu0 %v425
      %v493 = vpop.f32.mrf.mxu0
      %v494 = vadd.f32 %v391, %v493
      %495 = vmatmul.f32.gmra.mxu0 %v428
      %v496 = vpop.f32.mrf.mxu0
      %v497 = vadd.f32 %v391, %v496
      %498 = vmatmul.f32.gmra.mxu0 %v431
      %v499 = vpop.f32.mrf.mxu0
      %v500 = vadd.f32 %v391, %v499
      %501 = vmatmul.f32.gmra.mxu0 %v434
      %v502 = vpop.f32.mrf.mxu0
      %v503 = vadd.f32 %v391, %v502
      %504 = vmatmul.f32.gmra.mxu0 %v437
      %v505 = vpop.f32.mrf.mxu0
      %v506 = vadd.f32 %v391, %v505
      %507 = vmatmul.f32.gmra.mxu0 %v440
      %v508 = vpop.f32.mrf.mxu0
      %v509 = vadd.f32 %v391, %v508
      %510 = vdwg.mxu0
      %s511 = scalar_lea.vmem [#allocation2], 32
      %512 = vst.msk [vmem:[%s511 + $0x8] sm:$0xff] %vm329, %v464
      %513 = vst.msk [vmem:[%s511 + $0x10] sm:$0xff] %vm329, %v467
      %514 = vst.msk [vmem:[%s511 + $0x28] sm:$0xff] %vm329, %v470
      %515 = vst.msk [vmem:[%s511 + $0x30] sm:$0xff] %vm329, %v473
      %516 = vst.msk [vmem:[%s511 + $0x48] sm:$0xff] %vm329, %v476
      %517 = vst.msk [vmem:[%s511 + $0x50] sm:$0xff] %vm329, %v479
      %518 = vst.msk [vmem:[%s511 + $0x68] sm:$0xff] %vm329, %v482
      %519 = vst.msk [vmem:[%s511 + $0x70] sm:$0xff] %vm329, %v485
      %520 = vst.msk [vmem:[%s511 + $0x88] sm:$0xff] %vm329, %v488
      %521 = vst.msk [vmem:[%s511 + $0x90] sm:$0xff] %vm329, %v491
      %522 = vst.msk [vmem:[%s511 + $0xa8] sm:$0xff] %vm329, %v494
      %523 = vst.msk [vmem:[%s511 + $0xb0] sm:$0xff] %vm329, %v497
      %524 = vst.msk [vmem:[%s511 + $0xc8] sm:$0xff] %vm329, %v500
      %525 = vst.msk [vmem:[%s511 + $0xd0] sm:$0xff] %vm329, %v503
      %526 = vst.msk [vmem:[%s511 + $0xe8] sm:$0xff] %vm329, %v506
      %527 = vst.msk [vmem:[%s511 + $0xf0] sm:$0xff] %vm329, %v509
      %p528 = scmp.gt.s32.totalorder %s23, 0
      // Predicated region
      $region41: #{tpu_custom_call.1} parent=39 // pred_check
        %p529 = pneg %p528
      $region42: #{tpu_custom_call.1} parent=39 // pred_check_branch
        %531 = sbr.rel (%p529) target = $region44
      $region43: #{tpu_custom_call.1} parent=39 // pred_region
        %s532 = ssub.s32 %s371, 1
        %s533 = smul.u32 %s532, 16
        %s534 = scalar_lea.vmem %s298, %s533
        %v535 = vld [vmem:[%s534] sm:$0xff]
        %v536 = vld [vmem:[%s534 + $0x8] sm:$0xff]
        %v538 = vsel %vm393, %v535, 0
        %v541 = vsel %vm393, %v536, 0
        %543 = vmatpush.msra.mxu0 0.0
        %544 = vmatpush.msra.mxu0 0.0
        %545 = vmatpush.msra.mxu0 0.0
        %546 = vmatpush.msra.mxu0 0.0
        %547 = vmatpush.msra.mxu0 0.0
        %548 = vmatpush.msra.mxu0 0.0
        %549 = vmatpush.msra.mxu0 0.0
        %550 = vmatpush.msra.mxu0 0.0
        %551 = vmatpush.msra.mxu0 0.0
        %552 = vmatpush.msra.mxu0 0.0
        %553 = vmatpush.msra.mxu0 0.0
        %554 = vmatpush.msra.mxu0 0.0
        %555 = vmatpush.msra.mxu0 0.0
        %556 = vmatpush.msra.mxu0 0.0
        %557 = vmatpush.msra.mxu0 0.0
        %558 = vmatpush.msra.mxu0 %v444
        %559 = vmatmul.f32.gmra.mxu0 %v538
        %v560 = vpop.f32.mrf.mxu0
        %v561 = vadd.f32 %v391, %v560
        %562 = vmatmul.f32.gmra.mxu0 %v541
        %v563 = vpop.f32.mrf.mxu0
        %v564 = vadd.f32 %v391, %v563
        %565 = vdwg.mxu0
        %566 = vst.msk [vmem:[#allocation2 + $0x8] sm:$0xff] %vm329, %v561
        %567 = vst.msk [vmem:[#allocation2 + $0x10] sm:$0xff] %vm329, %v564
      $region44: #{tpu_custom_call.1} parent=39 // pred_fallthru
        _
      %p568 = scmp.lt.s32.totalorder %s23, 1
      // Predicated region
      $region45: #{tpu_custom_call.1} parent=39 // pred_check
        %p569 = pneg %p568
      $region46: #{tpu_custom_call.1} parent=39 // pred_check_branch
        %571 = sbr.rel (%p569) target = $region48
      $region47: #{tpu_custom_call.1} parent=39 // pred_region
        %s572 = sadd.s32 %s371, 8
        %s573 = smul.u32 %s572, 16
        %s574 = scalar_lea.vmem %s298, %s573
        %v575 = vld [vmem:[%s574] sm:$0xff]
        %v576 = vld [vmem:[%s574 + $0x8] sm:$0xff]
        %v578 = vsel %vm393, %v575, 0
        %v581 = vsel %vm393, %v576, 0
        %583 = vmatpush.msra.mxu0 0.0
        %584 = vmatpush.msra.mxu0 0.0
        %585 = vmatpush.msra.mxu0 0.0
        %586 = vmatpush.msra.mxu0 0.0
        %587 = vmatpush.msra.mxu0 0.0
        %588 = vmatpush.msra.mxu0 0.0
        %589 = vmatpush.msra.mxu0 0.0
        %590 = vmatpush.msra.mxu0 0.0
        %591 = vmatpush.msra.mxu0 0.0
        %592 = vmatpush.msra.mxu0 0.0
        %593 = vmatpush.msra.mxu0 0.0
        %594 = vmatpush.msra.mxu0 0.0
        %595 = vmatpush.msra.mxu0 0.0
        %596 = vmatpush.msra.mxu0 0.0
        %597 = vmatpush.msra.mxu0 0.0
        %598 = vmatpush.msra.mxu0 %v444
        %599 = vmatmul.f32.gmra.mxu0 %v578
        %v600 = vpop.f32.mrf.mxu0
        %v601 = vadd.f32 %v391, %v600
        %602 = vmatmul.f32.gmra.mxu0 %v581
        %v603 = vpop.f32.mrf.mxu0
        %v604 = vadd.f32 %v391, %v603
        %605 = vdwg.mxu0
        %s606 = scalar_lea.vmem [#allocation2], 288
        %607 = vst.msk [vmem:[%s606 + $0x8] sm:$0xff] %vm329, %v601
        %608 = vst.msk [vmem:[%s606 + $0x10] sm:$0xff] %vm329, %v604
      $region48: #{tpu_custom_call.1} parent=39 // pred_fallthru
        _
      %v609 = vld [vmem:[%s309] sm:$0xff]
      %v610 = vld [vmem:[%s309 + $0x8] sm:$0x1]
      %v611 = vld [vmem:[%s312] sm:$0x1]
      %v612 = vld [vmem:[#allocation2 + $0x7] sm:$0xff]
      %v613 = vld [vmem:[#allocation2 + $0xf] sm:$0xff]
      %v614 = vld [vmem:[#allocation2 + $0x27] sm:$0xff]
      %v615 = vld [vmem:[#allocation2 + $0x2f] sm:$0xff]
      %v616 = vld [vmem:[#allocation2 + $0x47] sm:$0xff]
      %v617 = vld [vmem:[#allocation2 + $0x4f] sm:$0xff]
      %v618 = vld [vmem:[#allocation2 + $0x67] sm:$0xff]
      %v619 = vld [vmem:[#allocation2 + $0x6f] sm:$0xff]
      %v620 = vld [vmem:[#allocation2 + $0x87] sm:$0xff]
      %v621 = vld [vmem:[#allocation2 + $0x8f] sm:$0xff]
      %v622 = vld [vmem:[#allocation2 + $0xa7] sm:$0xff]
      %v623 = vld [vmem:[#allocation2 + $0xaf] sm:$0xff]
      %v624 = vld [vmem:[#allocation2 + $0xc7] sm:$0xff]
      %v625 = vld [vmem:[#allocation2 + $0xcf] sm:$0xff]
      %v626 = vld [vmem:[#allocation2 + $0xe7] sm:$0xff]
      %v627 = vld [vmem:[#allocation2 + $0xef] sm:$0xff]
      %v628 = vperm.slane %v609, 0
      %v629 = vmul.f32 %v612, %v628
      %v630 = vmul.f32 %v613, %v628
      %v631 = vmul.f32 %v614, %v628
      %v632 = vmul.f32 %v615, %v628
      %v633 = vmul.f32 %v616, %v628
      %v634 = vmul.f32 %v617, %v628
      %v635 = vmul.f32 %v618, %v628
      %v636 = vmul.f32 %v619, %v628
      %v637 = vmul.f32 %v620, %v628
      %v638 = vmul.f32 %v621, %v628
      %v639 = vmul.f32 %v622, %v628
      %v640 = vmul.f32 %v623, %v628
      %v641 = vmul.f32 %v624, %v628
      %v642 = vmul.f32 %v625, %v628
      %v643 = vmul.f32 %v626, %v628
      %v644 = vmul.f32 %v627, %v628
      %v645 = vadd.f32 %v629, 0.0
      %v646 = vadd.f32 %v630, 0.0
      %v647 = vadd.f32 %v631, 0.0
      %v648 = vadd.f32 %v632, 0.0
      %v649 = vadd.f32 %v633, 0.0
      %v650 = vadd.f32 %v634, 0.0
      %v651 = vadd.f32 %v635, 0.0
      %v652 = vadd.f32 %v636, 0.0
      %v653 = vadd.f32 %v637, 0.0
      %v654 = vadd.f32 %v638, 0.0
      %v655 = vadd.f32 %v639, 0.0
      %v656 = vadd.f32 %v640, 0.0
      %v657 = vadd.f32 %v641, 0.0
      %v658 = vadd.f32 %v642, 0.0
      %v659 = vadd.f32 %v643, 0.0
      %v660 = vadd.f32 %v644, 0.0
      %v661 = vld [vmem:[#allocation2 + $0x8] sm:$0xff]
      %v662 = vld [vmem:[#allocation2 + $0x10] sm:$0xff]
      %v663 = vld [vmem:[#allocation2 + $0x28] sm:$0xff]
      %v664 = vld [vmem:[#allocation2 + $0x30] sm:$0xff]
      %v665 = vld [vmem:[#allocation2 + $0x48] sm:$0xff]
      %v666 = vld [vmem:[#allocation2 + $0x50] sm:$0xff]
      %v667 = vld [vmem:[#allocation2 + $0x68] sm:$0xff]
      %v668 = vld [vmem:[#allocation2 + $0x70] sm:$0xff]
      %v669 = vld [vmem:[#allocation2 + $0x88] sm:$0xff]
      %v670 = vld [vmem:[#allocation2 + $0x90] sm:$0xff]
      %v671 = vld [vmem:[#allocation2 + $0xa8] sm:$0xff]
      %v672 = vld [vmem:[#allocation2 + $0xb0] sm:$0xff]
      %v673 = vld [vmem:[#allocation2 + $0xc8] sm:$0xff]
      %v674 = vld [vmem:[#allocation2 + $0xd0] sm:$0xff]
      %v675 = vld [vmem:[#allocation2 + $0xe8] sm:$0xff]
      %v676 = vld [vmem:[#allocation2 + $0xf0] sm:$0xff]
      %v677 = vperm.slane %v609, 1
      %v678 = vmul.f32 %v661, %v677
      %v679 = vmul.f32 %v662, %v677
      %v680 = vmul.f32 %v663, %v677
      %v681 = vmul.f32 %v664, %v677
      %v682 = vmul.f32 %v665, %v677
      %v683 = vmul.f32 %v666, %v677
      %v684 = vmul.f32 %v667, %v677
      %v685 = vmul.f32 %v668, %v677
      %v686 = vmul.f32 %v669, %v677
      %v687 = vmul.f32 %v670, %v677
      %v688 = vmul.f32 %v671, %v677
      %v689 = vmul.f32 %v672, %v677
      %v690 = vmul.f32 %v673, %v677
      %v691 = vmul.f32 %v674, %v677
      %v692 = vmul.f32 %v675, %v677
      %v693 = vmul.f32 %v676, %v677
      %v694 = vadd.f32 %v645, %v678
      %v695 = vadd.f32 %v646, %v679
      %v696 = vadd.f32 %v647, %v680
      %v697 = vadd.f32 %v648, %v681
      %v698 = vadd.f32 %v649, %v682
      %v699 = vadd.f32 %v650, %v683
      %v700 = vadd.f32 %v651, %v684
      %v701 = vadd.f32 %v652, %v685
      %v702 = vadd.f32 %v653, %v686
      %v703 = vadd.f32 %v654, %v687
      %v704 = vadd.f32 %v655, %v688
      %v705 = vadd.f32 %v656, %v689
      %v706 = vadd.f32 %v657, %v690
      %v707 = vadd.f32 %v658, %v691
      %v708 = vadd.f32 %v659, %v692
      %v709 = vadd.f32 %v660, %v693
      %v710 = vld [vmem:[#allocation2 + $0x9] sm:$0xff]
      %v711 = vld [vmem:[#allocation2 + $0x11] sm:$0xff]
      %v712 = vld [vmem:[#allocation2 + $0x29] sm:$0xff]
      %v713 = vld [vmem:[#allocation2 + $0x31] sm:$0xff]
      %v714 = vld [vmem:[#allocation2 + $0x49] sm:$0xff]
      %v715 = vld [vmem:[#allocation2 + $0x51] sm:$0xff]
      %v716 = vld [vmem:[#allocation2 + $0x69] sm:$0xff]
      %v717 = vld [vmem:[#allocation2 + $0x71] sm:$0xff]
      %v718 = vld [vmem:[#allocation2 + $0x89] sm:$0xff]
      %v719 = vld [vmem:[#allocation2 + $0x91] sm:$0xff]
      %v720 = vld [vmem:[#allocation2 + $0xa9] sm:$0xff]
      %v721 = vld [vmem:[#allocation2 + $0xb1] sm:$0xff]
      %v722 = vld [vmem:[#allocation2 + $0xc9] sm:$0xff]
      %v723 = vld [vmem:[#allocation2 + $0xd1] sm:$0xff]
      %v724 = vld [vmem:[#allocation2 + $0xe9] sm:$0xff]
      %v725 = vld [vmem:[#allocation2 + $0xf1] sm:$0xff]
      %v726 = vperm.slane %v609, 2
      %v727 = vmul.f32 %v710, %v726
      %v728 = vmul.f32 %v711, %v726
      %v729 = vmul.f32 %v712, %v726
      %v730 = vmul.f32 %v713, %v726
      %v731 = vmul.f32 %v714, %v726
      %v732 = vmul.f32 %v715, %v726
      %v733 = vmul.f32 %v716, %v726
      %v734 = vmul.f32 %v717, %v726
      %v735 = vmul.f32 %v718, %v726
      %v736 = vmul.f32 %v719, %v726
      %v737 = vmul.f32 %v720, %v726
      %v738 = vmul.f32 %v721, %v726
      %v739 = vmul.f32 %v722, %v726
      %v740 = vmul.f32 %v723, %v726
      %v741 = vmul.f32 %v724, %v726
      %v742 = vmul.f32 %v725, %v726
      %v743 = vadd.f32 %v694, %v727
      %v744 = vadd.f32 %v695, %v728
      %v745 = vadd.f32 %v696, %v729
      %v746 = vadd.f32 %v697, %v730
      %v747 = vadd.f32 %v698, %v731
      %v748 = vadd.f32 %v699, %v732
      %v749 = vadd.f32 %v700, %v733
      %v750 = vadd.f32 %v701, %v734
      %v751 = vadd.f32 %v702, %v735
      %v752 = vadd.f32 %v703, %v736
      %v753 = vadd.f32 %v704, %v737
      %v754 = vadd.f32 %v705, %v738
      %v755 = vadd.f32 %v706, %v739
      %v756 = vadd.f32 %v707, %v740
      %v757 = vadd.f32 %v708, %v741
      %v758 = vadd.f32 %v709, %v742
      %v759 = vld [vmem:[%s511 + $0x7] sm:$0xff]
      %v760 = vld [vmem:[%s511 + $0xf] sm:$0xff]
      %v761 = vld [vmem:[%s511 + $0x27] sm:$0xff]
      %v762 = vld [vmem:[%s511 + $0x2f] sm:$0xff]
      %v763 = vld [vmem:[%s511 + $0x47] sm:$0xff]
      %v764 = vld [vmem:[%s511 + $0x4f] sm:$0xff]
      %v765 = vld [vmem:[%s511 + $0x67] sm:$0xff]
      %v766 = vld [vmem:[%s511 + $0x6f] sm:$0xff]
      %v767 = vld [vmem:[%s511 + $0x87] sm:$0xff]
      %v768 = vld [vmem:[%s511 + $0x8f] sm:$0xff]
      %v769 = vld [vmem:[%s511 + $0xa7] sm:$0xff]
      %v770 = vld [vmem:[%s511 + $0xaf] sm:$0xff]
      %v771 = vld [vmem:[%s511 + $0xc7] sm:$0xff]
      %v772 = vld [vmem:[%s511 + $0xcf] sm:$0xff]
      %v773 = vld [vmem:[%s511 + $0xe7] sm:$0xff]
      %v774 = vld [vmem:[%s511 + $0xef] sm:$0xff]
      %v775 = vperm.slane %v609, 3
      %v776 = vmul.f32 %v759, %v775
      %v777 = vmul.f32 %v760, %v775
      %v778 = vmul.f32 %v761, %v775
      %v779 = vmul.f32 %v762, %v775
      %v780 = vmul.f32 %v763, %v775
      %v781 = vmul.f32 %v764, %v775
      %v782 = vmul.f32 %v765, %v775
      %v783 = vmul.f32 %v766, %v775
      %v784 = vmul.f32 %v767, %v775
      %v785 = vmul.f32 %v768, %v775
      %v786 = vmul.f32 %v769, %v775
      %v787 = vmul.f32 %v770, %v775
      %v788 = vmul.f32 %v771, %v775
      %v789 = vmul.f32 %v772, %v775
      %v790 = vmul.f32 %v773, %v775
      %v791 = vmul.f32 %v774, %v775
      %v792 = vadd.f32 %v743, %v776
      %v793 = vadd.f32 %v744, %v777
      %v794 = vadd.f32 %v745, %v778
      %v795 = vadd.f32 %v746, %v779
      %v796 = vadd.f32 %v747, %v780
      %v797 = vadd.f32 %v748, %v781
      %v798 = vadd.f32 %v749, %v782
      %v799 = vadd.f32 %v750, %v783
      %v800 = vadd.f32 %v751, %v784
      %v801 = vadd.f32 %v752, %v785
      %v802 = vadd.f32 %v753, %v786
      %v803 = vadd.f32 %v754, %v787
      %v804 = vadd.f32 %v755, %v788
      %v805 = vadd.f32 %v756, %v789
      %v806 = vadd.f32 %v757, %v790
      %v807 = vadd.f32 %v758, %v791
      %v808 = vld [vmem:[%s511 + $0x8] sm:$0xff]
      %v809 = vld [vmem:[%s511 + $0x10] sm:$0xff]
      %v810 = vld [vmem:[%s511 + $0x28] sm:$0xff]
      %v811 = vld [vmem:[%s511 + $0x30] sm:$0xff]
      %v812 = vld [vmem:[%s511 + $0x48] sm:$0xff]
      %v813 = vld [vmem:[%s511 + $0x50] sm:$0xff]
      %v814 = vld [vmem:[%s511 + $0x68] sm:$0xff]
      %v815 = vld [vmem:[%s511 + $0x70] sm:$0xff]
      %v816 = vld [vmem:[%s511 + $0x88] sm:$0xff]
      %v817 = vld [vmem:[%s511 + $0x90] sm:$0xff]
      %v818 = vld [vmem:[%s511 + $0xa8] sm:$0xff]
      %v819 = vld [vmem:[%s511 + $0xb0] sm:$0xff]
      %v820 = vld [vmem:[%s511 + $0xc8] sm:$0xff]
      %v821 = vld [vmem:[%s511 + $0xd0] sm:$0xff]
      %v822 = vld [vmem:[%s511 + $0xe8] sm:$0xff]
      %v823 = vld [vmem:[%s511 + $0xf0] sm:$0xff]
      %v824 = vperm.slane %v609, 4
      %v825 = vmul.f32 %v808, %v824
      %v826 = vmul.f32 %v809, %v824
      %v827 = vmul.f32 %v810, %v824
      %v828 = vmul.f32 %v811, %v824
      %v829 = vmul.f32 %v812, %v824
      %v830 = vmul.f32 %v813, %v824
      %v831 = vmul.f32 %v814, %v824
      %v832 = vmul.f32 %v815, %v824
      %v833 = vmul.f32 %v816, %v824
      %v834 = vmul.f32 %v817, %v824
      %v835 = vmul.f32 %v818, %v824
      %v836 = vmul.f32 %v819, %v824
      %v837 = vmul.f32 %v820, %v824
      %v838 = vmul.f32 %v821, %v824
      %v839 = vmul.f32 %v822, %v824
      %v840 = vmul.f32 %v823, %v824
      %v841 = vadd.f32 %v792, %v825
      %v842 = vadd.f32 %v793, %v826
      %v843 = vadd.f32 %v794, %v827
      %v844 = vadd.f32 %v795, %v828
      %v845 = vadd.f32 %v796, %v829
      %v846 = vadd.f32 %v797, %v830
      %v847 = vadd.f32 %v798, %v831
      %v848 = vadd.f32 %v799, %v832
      %v849 = vadd.f32 %v800, %v833
      %v850 = vadd.f32 %v801, %v834
      %v851 = vadd.f32 %v802, %v835
      %v852 = vadd.f32 %v803, %v836
      %v853 = vadd.f32 %v804, %v837
      %v854 = vadd.f32 %v805, %v838
      %v855 = vadd.f32 %v806, %v839
      %v856 = vadd.f32 %v807, %v840
      %v857 = vld [vmem:[%s511 + $0x9] sm:$0xff]
      %v858 = vld [vmem:[%s511 + $0x11] sm:$0xff]
      %v859 = vld [vmem:[%s511 + $0x29] sm:$0xff]
      %v860 = vld [vmem:[%s511 + $0x31] sm:$0xff]
      %v861 = vld [vmem:[%s511 + $0x49] sm:$0xff]
      %v862 = vld [vmem:[%s511 + $0x51] sm:$0xff]
      %v863 = vld [vmem:[%s511 + $0x69] sm:$0xff]
      %v864 = vld [vmem:[%s511 + $0x71] sm:$0xff]
      %v865 = vld [vmem:[%s511 + $0x89] sm:$0xff]
      %v866 = vld [vmem:[%s511 + $0x91] sm:$0xff]
      %v867 = vld [vmem:[%s511 + $0xa9] sm:$0xff]
      %v868 = vld [vmem:[%s511 + $0xb1] sm:$0xff]
      %v869 = vld [vmem:[%s511 + $0xc9] sm:$0xff]
      %v870 = vld [vmem:[%s511 + $0xd1] sm:$0xff]
      %v871 = vld [vmem:[%s511 + $0xe9] sm:$0xff]
      %v872 = vld [vmem:[%s511 + $0xf1] sm:$0xff]
      %v873 = vperm.slane %v609, 5
      %v874 = vmul.f32 %v857, %v873
      %v875 = vmul.f32 %v858, %v873
      %v876 = vmul.f32 %v859, %v873
      %v877 = vmul.f32 %v860, %v873
      %v878 = vmul.f32 %v861, %v873
      %v879 = vmul.f32 %v862, %v873
      %v880 = vmul.f32 %v863, %v873
      %v881 = vmul.f32 %v864, %v873
      %v882 = vmul.f32 %v865, %v873
      %v883 = vmul.f32 %v866, %v873
      %v884 = vmul.f32 %v867, %v873
      %v885 = vmul.f32 %v868, %v873
      %v886 = vmul.f32 %v869, %v873
      %v887 = vmul.f32 %v870, %v873
      %v888 = vmul.f32 %v871, %v873
      %v889 = vmul.f32 %v872, %v873
      %v890 = vadd.f32 %v841, %v874
      %v891 = vadd.f32 %v842, %v875
      %v892 = vadd.f32 %v843, %v876
      %v893 = vadd.f32 %v844, %v877
      %v894 = vadd.f32 %v845, %v878
      %v895 = vadd.f32 %v846, %v879
      %v896 = vadd.f32 %v847, %v880
      %v897 = vadd.f32 %v848, %v881
      %v898 = vadd.f32 %v849, %v882
      %v899 = vadd.f32 %v850, %v883
      %v900 = vadd.f32 %v851, %v884
      %v901 = vadd.f32 %v852, %v885
      %v902 = vadd.f32 %v853, %v886
      %v903 = vadd.f32 %v854, %v887
      %v904 = vadd.f32 %v855, %v888
      %v905 = vadd.f32 %v856, %v889
      %s906 = scalar_lea.vmem [#allocation2], 64
      %v907 = vld [vmem:[%s906 + $0x7] sm:$0xff]
      %v908 = vld [vmem:[%s906 + $0xf] sm:$0xff]
      %v909 = vld [vmem:[%s906 + $0x27] sm:$0xff]
      %v910 = vld [vmem:[%s906 + $0x2f] sm:$0xff]
      %v911 = vld [vmem:[%s906 + $0x47] sm:$0xff]
      %v912 = vld [vmem:[%s906 + $0x4f] sm:$0xff]
      %v913 = vld [vmem:[%s906 + $0x67] sm:$0xff]
      %v914 = vld [vmem:[%s906 + $0x6f] sm:$0xff]
      %v915 = vld [vmem:[%s906 + $0x87] sm:$0xff]
      %v916 = vld [vmem:[%s906 + $0x8f] sm:$0xff]
      %v917 = vld [vmem:[%s906 + $0xa7] sm:$0xff]
      %v918 = vld [vmem:[%s906 + $0xaf] sm:$0xff]
      %v919 = vld [vmem:[%s906 + $0xc7] sm:$0xff]
      %v920 = vld [vmem:[%s906 + $0xcf] sm:$0xff]
      %v921 = vld [vmem:[%s906 + $0xe7] sm:$0xff]
      %v922 = vld [vmem:[%s906 + $0xef] sm:$0xff]
      %v923 = vperm.slane %v609, 6
      %v924 = vmul.f32 %v907, %v923
      %v925 = vmul.f32 %v908, %v923
      %v926 = vmul.f32 %v909, %v923
      %v927 = vmul.f32 %v910, %v923
      %v928 = vmul.f32 %v911, %v923
      %v929 = vmul.f32 %v912, %v923
      %v930 = vmul.f32 %v913, %v923
      %v931 = vmul.f32 %v914, %v923
      %v932 = vmul.f32 %v915, %v923
      %v933 = vmul.f32 %v916, %v923
      %v934 = vmul.f32 %v917, %v923
      %v935 = vmul.f32 %v918, %v923
      %v936 = vmul.f32 %v919, %v923
      %v937 = vmul.f32 %v920, %v923
      %v938 = vmul.f32 %v921, %v923
      %v939 = vmul.f32 %v922, %v923
      %v940 = vadd.f32 %v890, %v924
      %v941 = vadd.f32 %v891, %v925
      %v942 = vadd.f32 %v892, %v926
      %v943 = vadd.f32 %v893, %v927
      %v944 = vadd.f32 %v894, %v928
      %v945 = vadd.f32 %v895, %v929
      %v946 = vadd.f32 %v896, %v930
      %v947 = vadd.f32 %v897, %v931
      %v948 = vadd.f32 %v898, %v932
      %v949 = vadd.f32 %v899, %v933
      %v950 = vadd.f32 %v900, %v934
      %v951 = vadd.f32 %v901, %v935
      %v952 = vadd.f32 %v902, %v936
      %v953 = vadd.f32 %v903, %v937
      %v954 = vadd.f32 %v904, %v938
      %v955 = vadd.f32 %v905, %v939
      %v956 = vld [vmem:[%s906 + $0x8] sm:$0xff]
      %v957 = vld [vmem:[%s906 + $0x10] sm:$0xff]
      %v958 = vld [vmem:[%s906 + $0x28] sm:$0xff]
      %v959 = vld [vmem:[%s906 + $0x30] sm:$0xff]
      %v960 = vld [vmem:[%s906 + $0x48] sm:$0xff]
      %v961 = vld [vmem:[%s906 + $0x50] sm:$0xff]
      %v962 = vld [vmem:[%s906 + $0x68] sm:$0xff]
      %v963 = vld [vmem:[%s906 + $0x70] sm:$0xff]
      %v964 = vld [vmem:[%s906 + $0x88] sm:$0xff]
      %v965 = vld [vmem:[%s906 + $0x90] sm:$0xff]
      %v966 = vld [vmem:[%s906 + $0xa8] sm:$0xff]
      %v967 = vld [vmem:[%s906 + $0xb0] sm:$0xff]
      %v968 = vld [vmem:[%s906 + $0xc8] sm:$0xff]
      %v969 = vld [vmem:[%s906 + $0xd0] sm:$0xff]
      %v970 = vld [vmem:[%s906 + $0xe8] sm:$0xff]
      %v971 = vld [vmem:[%s906 + $0xf0] sm:$0xff]
      %v972 = vperm.slane %v609, 7
      %v973 = vmul.f32 %v956, %v972
      %v974 = vmul.f32 %v957, %v972
      %v975 = vmul.f32 %v958, %v972
      %v976 = vmul.f32 %v959, %v972
      %v977 = vmul.f32 %v960, %v972
      %v978 = vmul.f32 %v961, %v972
      %v979 = vmul.f32 %v962, %v972
      %v980 = vmul.f32 %v963, %v972
      %v981 = vmul.f32 %v964, %v972
      %v982 = vmul.f32 %v965, %v972
      %v983 = vmul.f32 %v966, %v972
      %v984 = vmul.f32 %v967, %v972
      %v985 = vmul.f32 %v968, %v972
      %v986 = vmul.f32 %v969, %v972
      %v987 = vmul.f32 %v970, %v972
      %v988 = vmul.f32 %v971, %v972
      %v989 = vadd.f32 %v940, %v973
      %v990 = vadd.f32 %v941, %v974
      %v991 = vadd.f32 %v942, %v975
      %v992 = vadd.f32 %v943, %v976
      %v993 = vadd.f32 %v944, %v977
      %v994 = vadd.f32 %v945, %v978
      %v995 = vadd.f32 %v946, %v979
      %v996 = vadd.f32 %v947, %v980
      %v997 = vadd.f32 %v948, %v981
      %v998 = vadd.f32 %v949, %v982
      %v999 = vadd.f32 %v950, %v983
      %v1000 = vadd.f32 %v951, %v984
      %v1001 = vadd.f32 %v952, %v985
      %v1002 = vadd.f32 %v953, %v986
      %v1003 = vadd.f32 %v954, %v987
      %v1004 = vadd.f32 %v955, %v988
      %v1005 = vld [vmem:[%s906 + $0x9] sm:$0xff]
      %v1006 = vld [vmem:[%s906 + $0x11] sm:$0xff]
      %v1007 = vld [vmem:[%s906 + $0x29] sm:$0xff]
      %v1008 = vld [vmem:[%s906 + $0x31] sm:$0xff]
      %v1009 = vld [vmem:[%s906 + $0x49] sm:$0xff]
      %v1010 = vld [vmem:[%s906 + $0x51] sm:$0xff]
      %v1011 = vld [vmem:[%s906 + $0x69] sm:$0xff]
      %v1012 = vld [vmem:[%s906 + $0x71] sm:$0xff]
      %v1013 = vld [vmem:[%s906 + $0x89] sm:$0xff]
      %v1014 = vld [vmem:[%s906 + $0x91] sm:$0xff]
      %v1015 = vld [vmem:[%s906 + $0xa9] sm:$0xff]
      %v1016 = vld [vmem:[%s906 + $0xb1] sm:$0xff]
      %v1017 = vld [vmem:[%s906 + $0xc9] sm:$0xff]
      %v1018 = vld [vmem:[%s906 + $0xd1] sm:$0xff]
      %v1019 = vld [vmem:[%s906 + $0xe9] sm:$0xff]
      %v1020 = vld [vmem:[%s906 + $0xf1] sm:$0xff]
      %v1021 = vperm.slane %v610, 0
      %v1022 = vmul.f32 %v1005, %v1021
      %v1023 = vmul.f32 %v1006, %v1021
      %v1024 = vmul.f32 %v1007, %v1021
      %v1025 = vmul.f32 %v1008, %v1021
      %v1026 = vmul.f32 %v1009, %v1021
      %v1027 = vmul.f32 %v1010, %v1021
      %v1028 = vmul.f32 %v1011, %v1021
      %v1029 = vmul.f32 %v1012, %v1021
      %v1030 = vmul.f32 %v1013, %v1021
      %v1031 = vmul.f32 %v1014, %v1021
      %v1032 = vmul.f32 %v1015, %v1021
      %v1033 = vmul.f32 %v1016, %v1021
      %v1034 = vmul.f32 %v1017, %v1021
      %v1035 = vmul.f32 %v1018, %v1021
      %v1036 = vmul.f32 %v1019, %v1021
      %v1037 = vmul.f32 %v1020, %v1021
      %v1038 = vadd.f32 %v989, %v1022
      %v1039 = vadd.f32 %v990, %v1023
      %v1040 = vadd.f32 %v991, %v1024
      %v1041 = vadd.f32 %v992, %v1025
      %v1042 = vadd.f32 %v993, %v1026
      %v1043 = vadd.f32 %v994, %v1027
      %v1044 = vadd.f32 %v995, %v1028
      %v1045 = vadd.f32 %v996, %v1029
      %v1046 = vadd.f32 %v997, %v1030
      %v1047 = vadd.f32 %v998, %v1031
      %v1048 = vadd.f32 %v999, %v1032
      %v1049 = vadd.f32 %v1000, %v1033
      %v1050 = vadd.f32 %v1001, %v1034
      %v1051 = vadd.f32 %v1002, %v1035
      %v1052 = vadd.f32 %v1003, %v1036
      %v1053 = vadd.f32 %v1004, %v1037
      %v1055 = vperm.slane %v611, 0
      %v1057 = vadd.f32 %v1038, %v1055
      %v1058 = vadd.f32 %v1039, %v1055
      %v1059 = vadd.f32 %v1040, %v1055
      %v1060 = vadd.f32 %v1041, %v1055
      %v1061 = vadd.f32 %v1042, %v1055
      %v1062 = vadd.f32 %v1043, %v1055
      %v1063 = vadd.f32 %v1044, %v1055
      %v1064 = vadd.f32 %v1045, %v1055
      %v1065 = vadd.f32 %v1046, %v1055
      %v1066 = vadd.f32 %v1047, %v1055
      %v1067 = vadd.f32 %v1048, %v1055
      %v1068 = vadd.f32 %v1049, %v1055
      %v1069 = vadd.f32 %v1050, %v1055
      %v1070 = vadd.f32 %v1051, %v1055
      %v1071 = vadd.f32 %v1052, %v1055
      %v1072 = vadd.f32 %v1053, %v1055
      %1073 = vst.msk [vmem:[%s325] sm:$0xff] %vm329, %v1057
      %1074 = vst.msk [vmem:[%s325 + $0x8] sm:$0xff] %vm329, %v1058
      %1075 = vst.msk [vmem:[%s325 + $0x10] sm:$0xff] %vm329, %v1059
      %1076 = vst.msk [vmem:[%s325 + $0x18] sm:$0xff] %vm329, %v1060
      %1077 = vst.msk [vmem:[%s325 + $0x20] sm:$0xff] %vm329, %v1061
      %1078 = vst.msk [vmem:[%s325 + $0x28] sm:$0xff] %vm329, %v1062
      %1079 = vst.msk [vmem:[%s325 + $0x30] sm:$0xff] %vm329, %v1063
      %1080 = vst.msk [vmem:[%s325 + $0x38] sm:$0xff] %vm329, %v1064
      %1081 = vst.msk [vmem:[%s325 + $0x40] sm:$0xff] %vm329, %v1065
      %1082 = vst.msk [vmem:[%s325 + $0x48] sm:$0xff] %vm329, %v1066
      %1083 = vst.msk [vmem:[%s325 + $0x50] sm:$0xff] %vm329, %v1067
      %1084 = vst.msk [vmem:[%s325 + $0x58] sm:$0xff] %vm329, %v1068
      %1085 = vst.msk [vmem:[%s325 + $0x60] sm:$0xff] %vm329, %v1069
      %1086 = vst.msk [vmem:[%s325 + $0x68] sm:$0xff] %vm329, %v1070
      %1087 = vst.msk [vmem:[%s325 + $0x70] sm:$0xff] %vm329, %v1071
      %1088 = vst.msk [vmem:[%s325 + $0x78] sm:$0xff] %vm329, %v1072
      %s1089 = smul.u32 8, %s23
      %p1090 = scmp.lt.s32.totalorder %s21, 1
      %s1091 = scalar_select %p1090, %s21, 1
      %p1092 = scmp.lt.s32.totalorder %s1089, 15
      %s1093 = scalar_select %p1092, %s1089, 15
      %p1094 = scmp.lt.s32.totalorder %s22, 0
      %s1095 = scalar_select %p1094, %s22, 0
      %s1096 = smul.addr %s1093, 2
      %s1097 = sadd.s32 %s1095, %s1096
      %s1098 = smul.addr %s1091, 32
      %s1099 = sadd.s32 %s1097, %s1098
      %s1100 = smul.addr %s1099, 8
      %s1101 = scalar_lea.vmem %s5, %s1100
      // Predicated region
      $region49: #{tpu_custom_call.1} parent=39 // pred_check
        %p1102 = pneg %p187
      $region50: #{tpu_custom_call.1} parent=39 // pred_check_branch
        %1104 = sbr.rel (%p1102) target = $region52
      $region51: #{tpu_custom_call.1} parent=39 // pred_region
        %s1105 = smul.u32 8, %s23
      $region52: #{tpu_custom_call.1} parent=39 // pred_fallthru
        _
    $region40: #{tpu_custom_call.1} parent=5 // pred_fallthru
      _
    %p1106 = scmp.le.s32.totalorder 2, %s11
    // Predicated region
    $region53: #{tpu_custom_call.1} parent=5 // pred_check
      %p1107 = pneg %p1106
    $region54: #{tpu_custom_call.1} parent=5 // pred_check_branch
      %1109 = sbr.rel (%p1107) target = $region56
    $region55: #{tpu_custom_call.1} parent=5 // pred_region
      %s1110 = ssub.s32 %s11, 2
      // Predicated region
      $region57: #{tpu_custom_call.1} parent=55 // pred_check
        %p1111 = pneg %p193
      $region58: #{tpu_custom_call.1} parent=55 // pred_check_branch
        %1113 = sbr.rel (%p1111) target = $region60
      $region59: #{tpu_custom_call.1} parent=55 // pred_region
        %s1114 = smul.u32 8, %s26
        %p1115 = scmp.lt.s32.totalorder %s24, 1
        %s1116 = scalar_select %p1115, %s24, 1
        %p1117 = scmp.lt.s32.totalorder %s1114, 15
        %s1118 = scalar_select %p1117, %s1114, 15
        %p1119 = scmp.lt.s32.totalorder %s25, 0
        %s1120 = scalar_select %p1119, %s25, 0
        %s1121 = smul.addr %s1118, 2
        %s1122 = sadd.s32 %s1120, %s1121
        %s1123 = smul.addr %s1116, 32
        %s1124 = sadd.s32 %s1122, %s1123
        %s1125 = smul.addr %s1124, 8
        %s1126 = scalar_lea.vmem %s5, %s1125
      $region60: #{tpu_custom_call.1} parent=55 // pred_fallthru
        _
    $region56: #{tpu_custom_call.1} parent=5 // pred_fallthru
      _
  $region6: #{tpu_custom_call.1} parent=0 // loop_footer
    %s15 = sadd.s32 1, %s11
  $region7: #{tpu_custom_call.1} parent=0 // loop_footer_branch
    %10 = sbr.rel target = $region3
  $region8: #{tpu_custom_call.1} parent=0 // loop_exit
    _

</llo_original>
